<compile_context>
chip_gen: v7x
topology: tpu7x:2x2x1
jax: 0.10.0
libtpu: 0.0.40
codegen_flags: <defaults>
</compile_context>

<pallas_src>
import functools

import jax
import jax.numpy as jnp
from jax.experimental import pallas as pl
from jax.experimental.pallas import tpu as pltpu


def _pixel_shuffle_kernel(x_ref, o_ref, *, scale, out_c, H, W):
    # x_ref: (1, C, H, W)  ->  o_ref: (1, out_c, H, scale*W)
    # Split the channel axis (non-minor dim: free, keeps the (H, W)
    # lane/sublane tiles intact), then interleave the `scale` phases along
    # the lane axis so a single dense store covers the whole output block.
    x = x_ref[0].reshape(out_c, scale, H, W)
    # o_view[c, h, s*W:(s+1)*W] = x[c, s, h, :]
    o_ref[0] = jnp.concatenate([x[:, s] for s in range(scale)], axis=-1)


def pixel_shuffle_height(x, scale=2):
    """Pallas implementation of the height-only Pixel_Shuffle forward pass."""
    B, C, H, W = x.shape
    assert C % scale == 0, (C, scale)
    out_c = C // scale

    nbytes = x.size * x.dtype.itemsize
    kernel = functools.partial(
        _pixel_shuffle_kernel, scale=scale, out_c=out_c, H=H, W=W)

    out4 = pl.pallas_call(
        kernel,
        out_shape=jax.ShapeDtypeStruct((B, out_c, H, scale * W), x.dtype),
        grid=(B,),
        in_specs=[pl.BlockSpec((1, C, H, W), lambda b: (b, 0, 0, 0))],
        out_specs=pl.BlockSpec((1, out_c, H, scale * W),
                               lambda b: (b, 0, 0, 0)),
        compiler_params=pltpu.CompilerParams(
            dimension_semantics=("parallel",)),
        cost_estimate=pl.CostEstimate(
            flops=0, transcendentals=0, bytes_accessed=2 * nbytes),
    )(x)

    # (B, out_c, H, scale*W) -> (B, out_c, H*scale, W): identical row-major
    # element order, so this is a zero-cost metadata reshape.
    return out4.reshape(B, out_c, H * scale, W)


def _reference(x, scale=2):
    """Pure-JAX reference: literal translation of the PyTorch module."""
    B, C, H, W = x.shape
    out_c = C // scale
    xv = x.reshape(B, out_c, scale, H, W)
    xv = jnp.transpose(xv, (0, 1, 3, 2, 4))  # (B, out_c, H, scale, W)
    return xv.reshape(B, out_c, H * scale, W)


if __name__ == "__main__":
    key = jax.random.PRNGKey(0)
    B, C, H, W = 2, 4, 16, 16  # NCHW, scale_factor=2 => out (2, 2, 32, 16)
    x = jax.random.normal(key, (B, C, H, W), jnp.float32)

    fn = jax.jit(functools.partial(pixel_shuffle_height, scale=2))
    out = jax.block_until_ready(fn(x))

    assert out.shape == (B, C // 2, H * 2, W), out.shape
    ref = _reference(x, 2)
    assert jnp.array_equal(out, ref), float(jnp.max(jnp.abs(out - ref)))
    print("KERNEL_OK")
</pallas_src>

<mosaic_0001>
module attributes {stable_mosaic.version = 11 : i64} {
  func.func @_pixel_shuffle_kernel(%arg0: i32, %arg1: memref<1x4x16x16xf32, #tpu.memory_space<vmem>>, %arg2: memref<1x2x16x32xf32, #tpu.memory_space<vmem>>) attributes {dimension_semantics = [#tpu.dimension_semantics<parallel>], iteration_bounds = array<i64: 2>, scalar_prefetch = 0 : i64, scratch_operands = 0 : i64, tpu.core_type = #tpu.core_type<tc>, window_params = [{transform_indices = @transform_0, window_bounds = array<i64: 1, 4, 16, 16>}, {transform_indices = @transform_1, window_bounds = array<i64: 1, 2, 16, 32>}]} {
    %c0 = arith.constant 0 : index
    %c0_0 = arith.constant 0 : index
    %c0_1 = arith.constant 0 : index
    %c0_2 = arith.constant 0 : index
    %0 = vector.load %arg1[%c0, %c0_0, %c0_1, %c0_2] : memref<1x4x16x16xf32, #tpu.memory_space<vmem>>, vector<1x4x16x16xf32>
    %1 = vector.shape_cast %0 : vector<1x4x16x16xf32> to vector<4x16x16xf32>
    %2 = vector.shape_cast %1 : vector<4x16x16xf32> to vector<2x2x16x16xf32>
    %3 = vector.extract_strided_slice %2 {offsets = [0, 0, 0, 0], sizes = [2, 1, 16, 16], strides = [1, 1, 1, 1]} : vector<2x2x16x16xf32> to vector<2x1x16x16xf32>
    %4 = vector.shape_cast %3 : vector<2x1x16x16xf32> to vector<2x16x16xf32>
    %5 = vector.extract_strided_slice %2 {offsets = [0, 1, 0, 0], sizes = [2, 1, 16, 16], strides = [1, 1, 1, 1]} : vector<2x2x16x16xf32> to vector<2x1x16x16xf32>
    %6 = vector.shape_cast %5 : vector<2x1x16x16xf32> to vector<2x16x16xf32>
    %7 = tpu.concatenate %4, %6 in 2 : vector<2x16x16xf32>, vector<2x16x16xf32> -> vector<2x16x32xf32>
    %c0_3 = arith.constant 0 : index
    %c0_4 = arith.constant 0 : index
    %c0_5 = arith.constant 0 : index
    %c0_6 = arith.constant 0 : index
    %8 = vector.load %arg2[%c0_3, %c0_4, %c0_5, %c0_6] : memref<1x2x16x32xf32, #tpu.memory_space<vmem>>, vector<1x2x16x32xf32>
    %9 = vector.shape_cast %8 : vector<1x2x16x32xf32> to vector<2x16x32xf32>
    %10 = vector.shape_cast %7 : vector<2x16x32xf32> to vector<1x2x16x32xf32>
    tpu.vector_store %arg2[%c0_3, %c0_4, %c0_5, %c0_6], %10 {strides = array<i32>} : memref<1x2x16x32xf32, #tpu.memory_space<vmem>>, vector<1x2x16x32xf32>,
    return
  }
  func.func @transform_0(%arg0: i32) -> (i32, i32, i32, i32) {
    %c0_i32 = arith.constant 0 : i32
    %c0_i32_0 = arith.constant 0 : i32
    %c0_i32_1 = arith.constant 0 : i32
    %c0_i32_2 = arith.constant 0 : i32
    return %arg0, %c0_i32, %c0_i32_0, %c0_i32_1 : i32, i32, i32, i32
  }
  func.func @transform_1(%arg0: i32) -> (i32, i32, i32, i32) {
    %c0_i32 = arith.constant 0 : i32
    %c0_i32_0 = arith.constant 0 : i32
    %c0_i32_1 = arith.constant 0 : i32
    %c0_i32_2 = arith.constant 0 : i32
    return %arg0, %c0_i32, %c0_i32_0, %c0_i32_1 : i32, i32, i32, i32
  }
}

</mosaic_0001>

<llo_original>
// kernel: pixel_shuffle_height.1
$region0: #{pixel_shuffle_height.1}
  #allocation0 [shape = 'u32[]', space=smem, size = 0x4, offset = 0x4, fixed_abs, tag = 'smem constant byte address 0x4 - core index']
  #allocation1 [shape = 'u32[144,128]{1,0:T(1,128)}', space=vmem, size = 0x12000, scoped, tag = 'internal scratch']
  %s0 = inlined_call_operand.hbm [shape: f32[2,4,16,16], index: 0, kind: input, shape index: {}]
  %s1 = inlined_call_operand.vmem [shape: f32[2,2,16,32], index: 1, kind: output, shape index: {}]
  %s2 = sld [smem:[#allocation0]]
  $region41: #{pixel_shuffle_height.1} parent=0
    _
  %s4 = ssub.s32 1, %s2
  %s5 = scalar_select 0, %s4, %s2
  $region1: #{pixel_shuffle_height.1} parent=0
    #allocation2 [shape = 'u8[65536]{0}', space=vmem, size = 0x10000, scoped, tag = 'input window, operand 0']
    #allocation3 [shape = 's32[2]{0}', space=sflag, size = 0x8, scoped, tag = 'scoped memory for pixel_shuffle_height.1']
    %6 = vsyncpa [#allocation3], 0
    %s7 = scalar_lea.sflag [#allocation3], 1
    %8 = vsyncpa %s7, 0
    loop: start=0, step=1, limit=4
    $region2: #{pixel_shuffle_height.1} parent=1 // loop_pre_header
      _
    $region3: #{pixel_shuffle_height.1} parent=1 // loop_header
      %s10 = sphi 0, %s14
      %p11 = scmp.ge.s32.totalorder %s10, 4
      %s20 = sphi 0, %s22
      %s23 = sphi 0, %s20
      %s24 = sphi 0, %s23
      %s40 = sphi 0, %s24
      %s46 = sphi 0, %s48
      %s49 = sphi 0, %s46
      %s50 = sphi 0, %s49
      %s66 = sphi 0, %s50
    $region4: #{pixel_shuffle_height.1} parent=1 // loop_header_branch
      %13 = sbr.rel (%p11) target = $region8
    $region5: #{pixel_shuffle_height.1} parent=1 // loop_body
      %s15 = ssub.s32 %s10, 1
      %s16 = ssub.s32 %s10, 2
      %s17 = sadd.s32 %s10, 1
      %s18 = ssub.s32 %s10, %s17
      %p19 = scmp.eq.s32.totalorder %s18, 0
      %s21 = sadd.s32 %s20, 1
      %s22 = scalar_select %p19, %s20, %s21
      %p25 = pneg %p19
      %p26 = scmp.eq.s32.totalorder %s10, 1
      %p27 = por %p25, %p26
      %p28 = scmp.ne.s32.totalorder %s20, %s23
      %p29 = scmp.eq.s32.totalorder %s10, 0
      %p30 = por %p28, %p29
      %p31 = scmp.ne.s32.totalorder %s20, %s23
      %p32 = scmp.eq.s32.totalorder %s15, 1
      %p33 = por %p31, %p32
      %p34 = scmp.ne.s32.totalorder %s23, %s24
      %p35 = scmp.eq.s32.totalorder %s15, 0
      %p36 = por %p34, %p35
      %p37 = scmp.ne.s32.totalorder %s23, %s24
      %p38 = scmp.eq.s32.totalorder %s16, 1
      %p39 = por %p37, %p38
      %p41 = scmp.ne.s32.totalorder %s24, %s40
      %p42 = scmp.eq.s32.totalorder %s16, 0
      %p43 = por %p41, %p42
      %s44 = ssub.s32 %s10, %s17
      %p45 = scmp.eq.s32.totalorder %s44, 0
      %s47 = sadd.s32 %s46, 1
      %s48 = scalar_select %p45, %s46, %s47
      %p51 = pneg %p45
      %p52 = scmp.eq.s32.totalorder %s10, 1
      %p53 = por %p51, %p52
      %p54 = scmp.ne.s32.totalorder %s46, %s49
      %p55 = scmp.eq.s32.totalorder %s10, 0
      %p56 = por %p54, %p55
      %p57 = scmp.ne.s32.totalorder %s46, %s49
      %p58 = scmp.eq.s32.totalorder %s15, 1
      %p59 = por %p57, %p58
      %p60 = scmp.ne.s32.totalorder %s49, %s50
      %p61 = scmp.eq.s32.totalorder %s15, 0
      %p62 = por %p60, %p61
      %p63 = scmp.ne.s32.totalorder %s49, %s50
      %p64 = scmp.eq.s32.totalorder %s16, 1
      %p65 = por %p63, %p64
      %p67 = scmp.ne.s32.totalorder %s50, %s66
      %p68 = scmp.eq.s32.totalorder %s16, 0
      %p69 = por %p67, %p68
      %p70 = scmp.le.s32.totalorder 1, %s10
      %p71 = scmp.lt.s32.totalorder %s10, 3
      %p72 = pnand %p70, %p71
      %p73 = pneg %p72
      // Predicated region
      $region9: #{pixel_shuffle_height.1} parent=5 // pred_check
        _
      $region10: #{pixel_shuffle_height.1} parent=5 // pred_check_branch
        %75 = sbr.rel (%p72) target = $region12
      $region11: #{pixel_shuffle_height.1} parent=5 // pred_region
        %s76 = ssub.s32 %s10, 1
      $region12: #{pixel_shuffle_height.1} parent=5 // pred_fallthru
        _
      %p77 = scmp.lt.s32.totalorder %s10, 2
      // Predicated region
      $region13: #{pixel_shuffle_height.1} parent=5 // pred_check
        %p78 = pneg %p77
      $region14: #{pixel_shuffle_height.1} parent=5 // pred_check_branch
        %80 = sbr.rel (%p78) target = $region16
      $region15: #{pixel_shuffle_height.1} parent=5 // pred_region
        // Predicated region
        $region17: #{pixel_shuffle_height.1} parent=15 // pred_check
          %p81 = pneg %p30
        $region18: #{pixel_shuffle_height.1} parent=15 // pred_check_branch
          %83 = sbr.rel (%p81) target = $region20
        $region19: #{pixel_shuffle_height.1} parent=15 // pred_region
          %s84 = sand.u32 %s20, 1
          %s85 = scalar_lea.sflag [#allocation3], %s84
          %s86 = sand.u32 %s20, 1
          %s87 = smul.addr %s86, 64
          %s88 = scalar_lea.vmem [#allocation2], %s87
          %s90 = ssub.s32 1024, 1024
          %91 = vsyncadd %s85, %s90
          %s92 = smul.addr %s10, 8
          %s93 = smul.addr %s92, 128
          %s94 = scalar_lea.hbm %s0, %s93
          %s95 = sshll.u32 %s88, 4
          %s96 = int_to_ptr.vmem [resolvable:$true] %s95
          %101 = dma.hbm_to_vmem [thread:$0]  %s94, 1024, %s96, %s85, 128, 128, 8
        $region20: #{pixel_shuffle_height.1} parent=15 // pred_fallthru
          _
      $region16: #{pixel_shuffle_height.1} parent=5 // pred_fallthru
        _
      %p102 = scmp.le.s32.totalorder 1, %s10
      %p103 = scmp.lt.s32.totalorder %s10, 3
      %p104 = pnand %p102, %p103
      %p105 = pneg %p104
      // Predicated region
      $region21: #{pixel_shuffle_height.1} parent=5 // pred_check
        _
      $region22: #{pixel_shuffle_height.1} parent=5 // pred_check_branch
        %107 = sbr.rel (%p104) target = $region24
      $region23: #{pixel_shuffle_height.1} parent=5 // pred_region
        %s108 = ssub.s32 %s10, 1
        %s109 = sand.u32 %s23, 1
        %s110 = scalar_lea.sflag [#allocation3], %s109
        %s111 = sand.u32 %s23, 1
        %s112 = smul.addr %s111, 64
        %s113 = scalar_lea.vmem [#allocation2], %s112
        // Predicated region
        $region25: #{pixel_shuffle_height.1} parent=23 // pred_check
          %p114 = pneg %p36
        $region26: #{pixel_shuffle_height.1} parent=23 // pred_check_branch
          %116 = sbr.rel (%p114) target = $region28
        $region27: #{pixel_shuffle_height.1} parent=23 // pred_region
          %117 = dma.done %s110, 1024
        $region28: #{pixel_shuffle_height.1} parent=23 // pred_fallthru
          _
        %s118 = sand.u32 %s23, 1
        %s119 = scalar_lea.sflag [#allocation3], %s118
        %s120 = sand.u32 %s23, 1
        %s121 = smul.addr %s120, 64
        %s122 = scalar_lea.vmem [#allocation2], %s121
        %p123 = pneg %p36
        %p124 = pneg %p33
        %p125 = pneg %p62
        %p126 = pneg %p59
        %p127 = scmp.lt.s32.totalorder %s15, 1
        %s128 = scalar_select %p127, %s15, 1
        %s129 = smul.addr %s128, 4
        %s130 = smul.addr %s129, 8
        %s131 = scalar_lea.vmem %s1, %s130
        %p132 = scmp.lt.s32.totalorder %s15, 1
        %s133 = scalar_select %p132, %s15, 1
        %s134 = smul.addr %s133, 4
        %s135 = smul.addr %s134, 8
        %s136 = scalar_lea.vmem %s1, %s135
        %v137 = vld [vmem:[%s113] sm:$0xff]
        %v138 = vld [vmem:[%s113 + $0x8] sm:$0xff]
        %v139 = vld [vmem:[%s113 + $0x10] sm:$0xff]
        %v140 = vld [vmem:[%s113 + $0x18] sm:$0xff]
        %v141 = vld [vmem:[%s113 + $0x20] sm:$0xff]
        %v142 = vld [vmem:[%s113 + $0x28] sm:$0xff]
        %v143 = vld [vmem:[%s113 + $0x30] sm:$0xff]
        %v144 = vld [vmem:[%s113 + $0x38] sm:$0xff]
        %149 = vrot.lane.b32.xlu0 %v139, 16
        %v150 = vpop.permute.xlu0 %149
        %151 = vrot.lane.b32.xlu0 %v140, 16
        %v152 = vpop.permute.xlu0 %151
        %153 = vrot.lane.b32.xlu0 %v143, 16
        %v154 = vpop.permute.xlu0 %153
        %155 = vrot.lane.b32.xlu0 %v144, 16
        %v156 = vpop.permute.xlu0 %155
        %vm161 = vcmask 130048
        %v162 = vsel %vm161, %v137, %v150
        %v163 = vsel %vm161, %v138, %v152
        %v164 = vsel %vm161, %v141, %v154
        %v165 = vsel %vm161, %v142, %v156
        %vm166 = vcmask 261120
        %167 = vst.msk [vmem:[%s136] sm:$0xff] %vm166, %v162
        %168 = vst.msk [vmem:[%s136 + $0x8] sm:$0xff] %vm166, %v163
        %169 = vst.msk [vmem:[%s136 + $0x10] sm:$0xff] %vm166, %v164
        %170 = vst.msk [vmem:[%s136 + $0x18] sm:$0xff] %vm166, %v165
        %p171 = scmp.lt.s32.totalorder %s15, 1
        %s172 = scalar_select %p171, %s15, 1
        %s173 = smul.addr %s172, 4
        %s174 = smul.addr %s173, 8
        %s175 = scalar_lea.vmem %s1, %s174
        // Predicated region
        $region29: #{pixel_shuffle_height.1} parent=23 // pred_check
          %p176 = pneg %p59
        $region30: #{pixel_shuffle_height.1} parent=23 // pred_check_branch
          %178 = sbr.rel (%p176) target = $region32
        $region31: #{pixel_shuffle_height.1} parent=23 // pred_region
          _
        $region32: #{pixel_shuffle_height.1} parent=23 // pred_fallthru
          _
      $region24: #{pixel_shuffle_height.1} parent=5 // pred_fallthru
        _
      %p179 = scmp.le.s32.totalorder 2, %s10
      // Predicated region
      $region33: #{pixel_shuffle_height.1} parent=5 // pred_check
        %p180 = pneg %p179
      $region34: #{pixel_shuffle_height.1} parent=5 // pred_check_branch
        %182 = sbr.rel (%p180) target = $region36
      $region35: #{pixel_shuffle_height.1} parent=5 // pred_region
        %s183 = ssub.s32 %s10, 2
        // Predicated region
        $region37: #{pixel_shuffle_height.1} parent=35 // pred_check
          %p184 = pneg %p65
        $region38: #{pixel_shuffle_height.1} parent=35 // pred_check_branch
          %186 = sbr.rel (%p184) target = $region40
        $region39: #{pixel_shuffle_height.1} parent=35 // pred_region
          %p187 = scmp.lt.s32.totalorder %s16, 1
          %s188 = scalar_select %p187, %s16, 1
          %s189 = smul.addr %s188, 4
          %s190 = smul.addr %s189, 8
          %s191 = scalar_lea.vmem %s1, %s190
        $region40: #{pixel_shuffle_height.1} parent=35 // pred_fallthru
          _
      $region36: #{pixel_shuffle_height.1} parent=5 // pred_fallthru
        _
    $region6: #{pixel_shuffle_height.1} parent=1 // loop_footer
      %s14 = sadd.s32 1, %s10
    $region7: #{pixel_shuffle_height.1} parent=1 // loop_footer_branch
      %9 = sbr.rel target = $region3
    $region8: #{pixel_shuffle_height.1} parent=1 // loop_exit
      _
    %192 = vsyncpa [#allocation3], 1
    %s193 = scalar_lea.sflag [#allocation3], 1
    %194 = vsyncpa %s193, 1

</llo_original>
